<compile_context>
chip_gen: v6e
topology: v6e:2x2x1
jax: 0.10.0
libtpu: 0.0.40
codegen_flags: <defaults>
</compile_context>

<pallas_src>
import jax
import jax.numpy as jnp
from jax.experimental import pallas as pl
from jax.experimental.pallas import tpu as pltpu

_WEIGHT_VMEM_BUDGET = 40 * 1024 * 1024  # resident-weight budget, under v7x 64 MiB/TC


def _round_up(x, m):
    return (x + m - 1) // m * m


def prepare_params(params, compute_dtype=jnp.bfloat16):
    """Cast the weight matrices to the MXU compute dtype ONCE (outside the
    per-call path).  Biases stay f32 (added to the f32 accumulator)."""
    return {
        "w1": params["w1"].astype(compute_dtype),
        "b1": params["b1"].astype(jnp.float32),
        "w2": params["w2"].astype(compute_dtype),
        "b2": params["b2"].astype(jnp.float32),
    }


def _pick_hidden_block(d_in, d, itemsize):
    """Largest multiple-of-128 divisor of d whose double-buffered streaming
    weight tiles fit the budget; None => keep W1/W2 fully VMEM-resident."""
    if (d_in * d + d * d) * itemsize <= _WEIGHT_VMEM_BUDGET:
        return None
    cands = [t for t in range(128, d, 128) if d % t == 0]
    if not cands:
        return None
    for t in reversed(cands):
        if 2 * (d_in + d) * t * itemsize <= _WEIGHT_VMEM_BUDGET:
            return t
    return cands[0]


# ----------------------------------------------------------------------------
# Fused kernel body.  grid = (row_blocks, hidden_blocks); hidden_blocks == 1
# in the resident-weight case.  Accumulation is f32 in a VMEM scratch.
# ----------------------------------------------------------------------------
def _ffn_kernel(x_ref, w1_ref, b1_ref, w2_ref, b2_ref, o_ref, acc_ref):
    h_idx = pl.program_id(1)

    @pl.when(h_idx == 0)
    def _():
        acc_ref[...] = jnp.zeros_like(acc_ref)

    x = x_ref[...].astype(w1_ref.dtype)  # cast in-kernel: no HBM round trip
    h = jnp.dot(x, w1_ref[...], preferred_element_type=jnp.float32)
    h = h + b1_ref[...].astype(jnp.float32)

    # tanh-approximate GELU (VPU + EUP tanh).
    # TODO(synk): nn.GELU() default is the exact erf form; erf has no clean
    # Mosaic lowering — tanh approximation differs by <~1e-3.
    c = 0.7978845608028654  # sqrt(2/pi)
    h = 0.5 * h * (1.0 + jnp.tanh(c * (h + 0.044715 * h * h * h)))

    acc_ref[...] += jnp.dot(h.astype(w2_ref.dtype), w2_ref[...],
                            preferred_element_type=jnp.float32)

    @pl.when(h_idx == pl.num_programs(1) - 1)
    def _():
        o_ref[...] = (acc_ref[...] + b2_ref[...].astype(jnp.float32)
                      ).astype(o_ref.dtype)


def feed_forward(x, params, *, block_rows=512, hidden_block=None,
                 compute_dtype=None, out_dtype=None, vmem_limit_bytes=None):
    """x: [..., dim * num_inputs] -> [..., dim].

    Dropout with the module default p=0 (or eval mode) is the identity and is
    elided.  Weights are used in whatever dtype `params` holds (call
    prepare_params() to cast them to bf16 once); the MXU accumulates in f32.
    Output dtype follows the input dtype unless out_dtype is given.
    """
    w1, b1, w2, b2 = params["w1"], params["b1"], params["w2"], params["b2"]
    d_in, d = w1.shape
    assert x.shape[-1] == d_in, (x.shape, w1.shape)
    assert w2.shape == (d, d)

    if compute_dtype is not None and w1.dtype != jnp.dtype(compute_dtype):
        # Fallback per-call cast (extra HBM traffic) — prefer prepare_params().
        w1 = w1.astype(compute_dtype)
        w2 = w2.astype(compute_dtype)
    compute_dtype = w1.dtype
    out_dtype = out_dtype or x.dtype
    b1 = b1.reshape(1, d).astype(jnp.float32)
    b2 = b2.reshape(1, d).astype(jnp.float32)

    orig_lead = x.shape[:-1]
    x2 = x.reshape(-1, d_in)
    m = x2.shape[0]

    itemsize = jnp.dtype(compute_dtype).itemsize
    out_itemsize = jnp.dtype(out_dtype).itemsize
    # bf16 packs 2 rows/sublane -> align row tiles to 16 when anything is bf16.
    row_align = 8 if (itemsize == 4 and out_itemsize == 4) else 16

    tm = max(row_align, min(block_rows, _round_up(m, row_align)))
    mp = _round_up(m, tm)
    if mp != m:  # only pad when tm does not already divide m
        x2 = jnp.pad(x2, ((0, mp - m), (0, 0)))

    if hidden_block is None:
        hidden_block = _pick_hidden_block(d_in, d, itemsize)
    split = (hidden_block is not None and hidden_block < d
             and d % hidden_block == 0 and hidden_block % 128 == 0)
    th = hidden_block if split else d
    n_h = d // th

    resident = pl.Buffered(1)  # fetched once; double-buffering wastes VMEM
    if split:
        w_specs = [
            pl.BlockSpec((d_in, th), lambda i, j: (0, j)),   # W1 column tile
            pl.BlockSpec((1, th), lambda i, j: (0, j)),      # b1 tile
            pl.BlockSpec((th, d), lambda i, j: (j, 0)),      # W2 row tile
            pl.BlockSpec((1, d), lambda i, j: (0, 0), pipeline_mode=resident),
        ]
        w_vmem = 2 * (d_in * th + th * d) * itemsize + 2 * th * 4 + d * 4
    else:
        w_specs = [
            pl.BlockSpec((d_in, d), lambda i, j: (0, 0), pipeline_mode=resident),
            pl.BlockSpec((1, d), lambda i, j: (0, 0), pipeline_mode=resident),
            pl.BlockSpec((d, d), lambda i, j: (0, 0), pipeline_mode=resident),
            pl.BlockSpec((1, d), lambda i, j: (0, 0), pipeline_mode=resident),
        ]
        w_vmem = (d_in * d + d * d) * itemsize + 2 * d * 4

    if vmem_limit_bytes is None:
        io_vmem = 2 * tm * d_in * x2.dtype.itemsize + 2 * tm * d * out_itemsize
        acc_vmem = tm * d * 4
        needed = w_vmem + io_vmem + acc_vmem
        vmem_limit_bytes = int(min(max(needed + (8 << 20), 32 << 20), 64 << 20))

    flops = 2 * mp * d_in * d + 2 * mp * d * d
    bytes_accessed = (mp * d_in * x2.dtype.itemsize + mp * d * out_itemsize
                      + (d_in * d + d * d) * itemsize + 2 * d * 4)
    cost = pl.CostEstimate(flops=int(flops), transcendentals=int(mp * d),
                           bytes_accessed=int(bytes_accessed))

    out = pl.pallas_call(
        _ffn_kernel,
        out_shape=jax.ShapeDtypeStruct((mp, d), out_dtype),
        grid_spec=pltpu.PrefetchScalarGridSpec(
            num_scalar_prefetch=0,
            grid=(mp // tm, n_h),
            in_specs=[pl.BlockSpec((tm, d_in), lambda i, j: (i, 0))] + w_specs,
            out_specs=pl.BlockSpec((tm, d), lambda i, j: (i, 0)),
            scratch_shapes=[pltpu.VMEM((tm, d), jnp.float32)],
        ),
        compiler_params=pltpu.CompilerParams(
            dimension_semantics=("parallel", "arbitrary"),
            vmem_limit_bytes=vmem_limit_bytes),
        cost_estimate=cost,
    )(x2, w1, b1, w2, b2)

    if mp != m:
        out = out[:m]
    return out.reshape(*orig_lead, d)


# ----------------------------------------------------------------------------
# Deterministic synthetic parameters (not a checkpoint) + pure-JAX reference.
# ----------------------------------------------------------------------------
def init_params(key, dim, num_inputs=1):
    d_in = dim * num_inputs
    k1, k2, k3, k4 = jax.random.split(key, 4)
    s1 = 1.0 / (d_in ** 0.5)
    s2 = 1.0 / (dim ** 0.5)
    return {
        "w1": s1 * jax.random.normal(k1, (d_in, dim), jnp.float32),
        "b1": s1 * jax.random.normal(k2, (1, dim), jnp.float32),
        "w2": s2 * jax.random.normal(k3, (dim, dim), jnp.float32),
        "b2": s2 * jax.random.normal(k4, (1, dim), jnp.float32),
    }


def reference(x, params):
    h = jnp.matmul(x, params["w1"]) + params["b1"]
    c = 0.7978845608028654
    h = 0.5 * h * (1.0 + jnp.tanh(c * (h + 0.044715 * h ** 3)))
    return jnp.matmul(h, params["w2"]) + params["b2"]


if __name__ == "__main__":
    key = jax.random.PRNGKey(0)
    kx, kp, kx2, kp2 = jax.random.split(key, 4)

    # --- case 1: dim=128, num_inputs=1 ------------------------------------
    B, S, dim, num_inputs = 2, 16, 128, 1
    x = jax.random.normal(kx, (B, S, dim * num_inputs), jnp.float32)
    params = init_params(kp, dim, num_inputs)
    y_ref = reference(x, params)

    # f32 weights (tight numerical check), small row tiles -> 2 parallel blocks.
    y = jax.block_until_ready(feed_forward(x, params, block_rows=16))
    assert y.shape == (B, S, dim) and y.dtype == x.dtype
    assert bool(jnp.all(jnp.isfinite(y)))
    assert bool(jnp.allclose(y, y_ref, atol=1e-4, rtol=1e-4)), "f32 mismatch"

    # bf16 weights (MXU-native on v5e/v6e/v7x), cast once via prepare_params.
    params_bf16 = prepare_params(params, jnp.bfloat16)
    y_bf = jax.block_until_ready(feed_forward(x, params_bf16))
    assert y_bf.dtype == jnp.float32  # output follows input dtype
    assert bool(jnp.allclose(y_bf, y_ref, atol=8e-2, rtol=5e-2)), "bf16 mismatch"

    # bf16-in -> bf16-out path (halved output writeback).
    y_bb = jax.block_until_ready(feed_forward(x.astype(jnp.bfloat16), params_bf16))
    assert y_bb.dtype == jnp.bfloat16
    assert bool(jnp.allclose(y_bb.astype(jnp.float32), y_ref,
                             atol=1.5e-1, rtol=1e-1)), "bf16 io mismatch"

    # --- case 2: hidden-dim-tiled path (forced small hidden_block) ---------
    dim2, num_inputs2 = 256, 2
    x2 = jax.random.normal(kx2, (2, 8, dim2 * num_inputs2), jnp.float32)
    params2 = init_params(kp2, dim2, num_inputs2)
    y2 = jax.block_until_ready(feed_forward(x2, params2, hidden_block=128))
    y2_ref = reference(x2, params2)
    assert y2.shape == (2, 8, dim2)
    assert bool(jnp.allclose(y2, y2_ref, atol=1e-4, rtol=1e-4)), "hidden-split mismatch"

    print("KERNEL_OK")
</pallas_src>

<mosaic_0001>
module attributes {stable_mosaic.version = 11 : i64} {
  func.func @_ffn_kernel(%arg0: i32, %arg1: i32, %arg2: memref<16x128xf32, #tpu.memory_space<vmem>>, %arg3: memref<128x128xf32, #tpu.memory_space<vmem>>, %arg4: memref<1x128xf32, #tpu.memory_space<vmem>>, %arg5: memref<128x128xf32, #tpu.memory_space<vmem>>, %arg6: memref<1x128xf32, #tpu.memory_space<vmem>>, %arg7: memref<16x128xf32, #tpu.memory_space<vmem>>, %arg8: memref<16x128xf32, #tpu.memory_space<vmem>>) attributes {dimension_semantics = [#tpu.dimension_semantics<parallel>, #tpu.dimension_semantics<arbitrary>], iteration_bounds = array<i64: 2, 1>, scalar_prefetch = 0 : i64, scratch_operands = 1 : i64, tpu.core_type = #tpu.core_type<tc>, window_params = [{transform_indices = @transform_0, window_bounds = array<i64: 16, 128>}, {pipeline_mode = #tpu.pipeline_mode<synchronous>, transform_indices = @transform_1, window_bounds = array<i64: 128, 128>}, {pipeline_mode = #tpu.pipeline_mode<synchronous>, transform_indices = @transform_2, window_bounds = array<i64: 1, 128>}, {pipeline_mode = #tpu.pipeline_mode<synchronous>, transform_indices = @transform_3, window_bounds = array<i64: 128, 128>}, {pipeline_mode = #tpu.pipeline_mode<synchronous>, transform_indices = @transform_4, window_bounds = array<i64: 1, 128>}, {transform_indices = @transform_5, window_bounds = array<i64: 16, 128>}]} {
    %c0_i32 = arith.constant 0 : i32
    %0 = arith.cmpi eq, %arg1, %c0_i32 : i32
    %1 = arith.extui %0 : i1 to i32
    %c0_i32_0 = arith.constant 0 : i32
    %2 = arith.cmpi ne, %1, %c0_i32_0 : i32
    scf.if %2 {
      %cst_19 = arith.constant 0.000000e+00 : f32
      %30 = vector.broadcast %cst_19 : f32 to vector<16x128xf32>
      %c0_20 = arith.constant 0 : index
      %c0_21 = arith.constant 0 : index
      %31 = vector.load %arg8[%c0_20, %c0_21] : memref<16x128xf32, #tpu.memory_space<vmem>>, vector<16x128xf32>
      tpu.vector_store %arg8[%c0_20, %c0_21], %30 {strides = array<i32>} : memref<16x128xf32, #tpu.memory_space<vmem>>, vector<16x128xf32>,
    } else {
    }
    %c0 = arith.constant 0 : index
    %c0_1 = arith.constant 0 : index
    %3 = vector.load %arg2[%c0, %c0_1] : memref<16x128xf32, #tpu.memory_space<vmem>>, vector<16x128xf32>
    %c0_2 = arith.constant 0 : index
    %c0_3 = arith.constant 0 : index
    %4 = vector.load %arg3[%c0_2, %c0_3] : memref<128x128xf32, #tpu.memory_space<vmem>>, vector<128x128xf32>
    %cst = arith.constant dense<0.000000e+00> : vector<16x128xf32>
    %5 = tpu.matmul %3, %4, %cst {dimension_numbers = #tpu.dot_dimension_numbers<[1], [0], [0], [1], [0, 0, 1, 1], [], []>} : vector<16x128xf32>, vector<128x128xf32>, vector<16x128xf32> -> vector<16x128xf32>
    %c0_4 = arith.constant 0 : index
    %c0_5 = arith.constant 0 : index
    %6 = vector.load %arg4[%c0_4, %c0_5] : memref<1x128xf32, #tpu.memory_space<vmem>>, vector<1x128xf32>
    %7 = vector.broadcast %6 : vector<1x128xf32> to vector<16x128xf32>
    %8 = arith.addf %5, %7 : vector<16x128xf32>
    %cst_6 = arith.constant 5.000000e-01 : f32
    %9 = vector.broadcast %cst_6 : f32 to vector<16x128xf32>
    %10 = arith.mulf %9, %8 : vector<16x128xf32>
    %cst_7 = arith.constant 4.471500e-02 : f32
    %11 = vector.broadcast %cst_7 : f32 to vector<16x128xf32>
    %12 = arith.mulf %11, %8 : vector<16x128xf32>
    %13 = arith.mulf %12, %8 : vector<16x128xf32>
    %14 = arith.mulf %13, %8 : vector<16x128xf32>
    %15 = arith.addf %8, %14 : vector<16x128xf32>
    %cst_8 = arith.constant 0.797884583 : f32
    %16 = vector.broadcast %cst_8 : f32 to vector<16x128xf32>
    %17 = arith.mulf %16, %15 : vector<16x128xf32>
    %18 = math.tanh %17 : vector<16x128xf32>
    %cst_9 = arith.constant 1.000000e+00 : f32
    %19 = vector.broadcast %cst_9 : f32 to vector<16x128xf32>
    %20 = arith.addf %19, %18 : vector<16x128xf32>
    %21 = arith.mulf %10, %20 : vector<16x128xf32>
    %c0_10 = arith.constant 0 : index
    %c0_11 = arith.constant 0 : index
    %22 = vector.load %arg8[%c0_10, %c0_11] : memref<16x128xf32, #tpu.memory_space<vmem>>, vector<16x128xf32>
    %c0_12 = arith.constant 0 : index
    %c0_13 = arith.constant 0 : index
    %23 = vector.load %arg5[%c0_12, %c0_13] : memref<128x128xf32, #tpu.memory_space<vmem>>, vector<128x128xf32>
    %cst_14 = arith.constant dense<0.000000e+00> : vector<16x128xf32>
    %24 = tpu.matmul %21, %23, %cst_14 {dimension_numbers = #tpu.dot_dimension_numbers<[1], [0], [0], [1], [0, 0, 1, 1], [], []>} : vector<16x128xf32>, vector<128x128xf32>, vector<16x128xf32> -> vector<16x128xf32>
    %25 = arith.addf %22, %24 : vector<16x128xf32>
    %c0_15 = arith.constant 0 : index
    %c0_16 = arith.constant 0 : index
    %26 = vector.load %arg8[%c0_15, %c0_16] : memref<16x128xf32, #tpu.memory_space<vmem>>, vector<16x128xf32>
    tpu.vector_store %arg8[%c0_15, %c0_16], %25 {strides = array<i32>} : memref<16x128xf32, #tpu.memory_space<vmem>>, vector<16x128xf32>,
    %c0_i32_17 = arith.constant 0 : i32
    %27 = arith.cmpi eq, %arg1, %c0_i32_17 : i32
    %28 = arith.extui %27 : i1 to i32
    %c0_i32_18 = arith.constant 0 : i32
    %29 = arith.cmpi ne, %28, %c0_i32_18 : i32
    scf.if %29 {
      %c0_19 = arith.constant 0 : index
      %c0_20 = arith.constant 0 : index
      %30 = vector.load %arg8[%c0_19, %c0_20] : memref<16x128xf32, #tpu.memory_space<vmem>>, vector<16x128xf32>
      %c0_21 = arith.constant 0 : index
      %c0_22 = arith.constant 0 : index
      %31 = vector.load %arg6[%c0_21, %c0_22] : memref<1x128xf32, #tpu.memory_space<vmem>>, vector<1x128xf32>
      %32 = vector.broadcast %31 : vector<1x128xf32> to vector<16x128xf32>
      %33 = arith.addf %30, %32 : vector<16x128xf32>
      %c0_23 = arith.constant 0 : index
      %c0_24 = arith.constant 0 : index
      %34 = vector.load %arg7[%c0_23, %c0_24] : memref<16x128xf32, #tpu.memory_space<vmem>>, vector<16x128xf32>
      tpu.vector_store %arg7[%c0_23, %c0_24], %33 {strides = array<i32>} : memref<16x128xf32, #tpu.memory_space<vmem>>, vector<16x128xf32>,
    } else {
    }
    return
  }
  func.func @transform_0(%arg0: i32, %arg1: i32) -> (i32, i32) {
    %c0_i32 = arith.constant 0 : i32
    %c0_i32_0 = arith.constant 0 : i32
    return %arg0, %c0_i32 : i32, i32
  }
  func.func @transform_1(%arg0: i32, %arg1: i32) -> (i32, i32) {
    %c0_i32 = arith.constant 0 : i32
    %c0_i32_0 = arith.constant 0 : i32
    %c0_i32_1 = arith.constant 0 : i32
    return %c0_i32, %c0_i32_0 : i32, i32
  }
  func.func @transform_2(%arg0: i32, %arg1: i32) -> (i32, i32) {
    %c0_i32 = arith.constant 0 : i32
    %c0_i32_0 = arith.constant 0 : i32
    %c0_i32_1 = arith.constant 0 : i32
    return %c0_i32, %c0_i32_0 : i32, i32
  }
  func.func @transform_3(%arg0: i32, %arg1: i32) -> (i32, i32) {
    %c0_i32 = arith.constant 0 : i32
    %c0_i32_0 = arith.constant 0 : i32
    %c0_i32_1 = arith.constant 0 : i32
    return %c0_i32, %c0_i32_0 : i32, i32
  }
  func.func @transform_4(%arg0: i32, %arg1: i32) -> (i32, i32) {
    %c0_i32 = arith.constant 0 : i32
    %c0_i32_0 = arith.constant 0 : i32
    %c0_i32_1 = arith.constant 0 : i32
    return %c0_i32, %c0_i32_0 : i32, i32
  }
  func.func @transform_5(%arg0: i32, %arg1: i32) -> (i32, i32) {
    %c0_i32 = arith.constant 0 : i32
    %c0_i32_0 = arith.constant 0 : i32
    return %arg0, %c0_i32 : i32, i32
  }
}

</mosaic_0001>

<llo_original>
// kernel: tpu_custom_call.1
$region0: #{tpu_custom_call.1}
  #allocation0 [shape = 'u32[]', space=smem, size = 0x4, offset = 0x4, fixed_abs, tag = 'smem constant byte address 0x4 - core index']
  #allocation1 [shape = 'u32[144,128]{1,0:T(1,128)}', space=vmem, size = 0x12000, scoped, tag = 'internal scratch']
  #allocation2 [shape = 'f32[16,128]{1,0:T(8,128)}', space=vmem, size = 0x2000, scoped, tag = 'scratch operand']
  %s0 = inlined_call_operand.hbm [shape: f32[32,128], index: 0, kind: input, shape index: {}]
  %s1 = inlined_call_operand.hbm [shape: f32[128,128], index: 1, kind: input, shape index: {}]
  %s2 = inlined_call_operand.vmem [shape: f32[1,128], index: 2, kind: input, shape index: {}]
  %s3 = inlined_call_operand.hbm [shape: f32[128,128], index: 3, kind: input, shape index: {}]
  %s4 = inlined_call_operand.vmem [shape: f32[1,128], index: 4, kind: input, shape index: {}]
  %s5 = inlined_call_operand.hbm [shape: f32[32,128], index: 5, kind: output, shape index: {}]
  %s6 = sld [smem:[#allocation0]]
  $region73: #{tpu_custom_call.1} parent=0
    _
  %s8 = ssub.s32 1, %s6
  %s9 = scalar_select 0, %s8, %s6
  $region1: #{tpu_custom_call.1} parent=0
    #allocation3 [shape = 'u8[16384]{0}', space=vmem, size = 0x4000, scoped, tag = 'input window, operand 0']
    #allocation4 [shape = 's32[2]{0}', space=sflag, size = 0x8, scoped, tag = 'scoped memory for tpu_custom_call.1']
    #allocation5 [shape = 's32[2]{0}', space=sflag, size = 0x8, scoped, tag = 'scoped memory for tpu_custom_call.1']
    #allocation6 [shape = 'u8[65536]{0}', space=vmem, size = 0x10000, scoped, tag = 'input window, operand 1, single buffered']
    #allocation7 [shape = 's32[1]{0}', space=sflag, size = 0x4, scoped, tag = 'scoped memory for tpu_custom_call.1']
    #allocation8 [shape = 'u8[65536]{0}', space=vmem, size = 0x10000, scoped, tag = 'input window, operand 3, single buffered']
    #allocation9 [shape = 'u8[16384]{0}', space=vmem, size = 0x4000, scoped, tag = 'output window, operand 0']
    %10 = vsyncpa [#allocation4], 0
    %s11 = scalar_lea.sflag [#allocation4], 1
    %12 = vsyncpa %s11, 0
    %13 = vsyncpa [#allocation7], 0
    %14 = vsyncpa [#allocation5], 0
    %s15 = scalar_lea.sflag [#allocation5], 1
    %16 = vsyncpa %s15, 0
    loop: start=0, step=1, limit=4
    $region2: #{tpu_custom_call.1} parent=1 // loop_pre_header
      _
    $region3: #{tpu_custom_call.1} parent=1 // loop_header
      %s18 = sphi 0, %s22
      %p19 = scmp.ge.s32.totalorder %s18, 4
      %s25 = sphi 0, %s37
      %s26 = sphi 0, %s33
      %s27 = sphi 0, %s25
      %s28 = sphi 0, %s26
      %s29 = sphi 0, %s27
      %s30 = sphi 0, %s28
      %s40 = sphi 0, %s42
      %s43 = sphi 0, %s40
      %s44 = sphi 0, %s43
      %s60 = sphi 0, %s44
      %s64 = sphi 0, %s64
      %s66 = sphi 0, %s64
      %s67 = sphi 0, %s66
      %s81 = sphi 0, %s67
      %s85 = sphi 0, %s85
      %s87 = sphi 0, %s85
      %s88 = sphi 0, %s87
      %s102 = sphi 0, %s88
      %s106 = sphi 0, %s106
      %s108 = sphi 0, %s106
      %s109 = sphi 0, %s108
      %s123 = sphi 0, %s109
      %s127 = sphi 0, %s127
      %s129 = sphi 0, %s127
      %s130 = sphi 0, %s129
      %s144 = sphi 0, %s130
      %s150 = sphi 0, %s152
      %s153 = sphi 0, %s150
      %s154 = sphi 0, %s153
      %s170 = sphi 0, %s154
    $region4: #{tpu_custom_call.1} parent=1 // loop_header_branch
      %21 = sbr.rel (%p19) target = $region8
    $region5: #{tpu_custom_call.1} parent=1 // loop_body
      %s23 = ssub.s32 %s18, 1
      %s24 = ssub.s32 %s18, 2
      %s31 = sadd.s32 1, %s26
      %p32 = scmp.ge.s32.totalorder %s31, 1
      %s33 = scalar_select %p32, 0, %s31
      %s34 = sadd.s32 1, %s25
      %s35 = scalar_select %p32, %s34, %s25
      %p36 = scmp.ge.s32.totalorder %s35, 2
      %s37 = scalar_select %p36, 0, %s35
      %s38 = ssub.s32 %s25, %s37
      %p39 = scmp.eq.s32.totalorder %s38, 0
      %s41 = sadd.s32 %s40, 1
      %s42 = scalar_select %p39, %s40, %s41
      %p45 = pneg %p39
      %p46 = scmp.eq.s32.totalorder %s18, 1
      %p47 = por %p45, %p46
      %p48 = scmp.ne.s32.totalorder %s40, %s43
      %p49 = scmp.eq.s32.totalorder %s18, 0
      %p50 = por %p48, %p49
      %p51 = scmp.ne.s32.totalorder %s40, %s43
      %p52 = scmp.eq.s32.totalorder %s23, 1
      %p53 = por %p51, %p52
      %p54 = scmp.ne.s32.totalorder %s43, %s44
      %p55 = scmp.eq.s32.totalorder %s23, 0
      %p56 = por %p54, %p55
      %p57 = scmp.ne.s32.totalorder %s43, %s44
      %p58 = scmp.eq.s32.totalorder %s24, 1
      %p59 = por %p57, %p58
      %p61 = scmp.ne.s32.totalorder %s44, %s60
      %p62 = scmp.eq.s32.totalorder %s24, 0
      %p63 = por %p61, %p62
      %s65 = sadd.s32 %s64, 1
      %p68 = scmp.eq.s32.totalorder %s18, 1
      %p69 = scmp.ne.s32.totalorder %s64, %s66
      %p70 = scmp.eq.s32.totalorder %s18, 0
      %p71 = por %p69, %p70
      %p72 = scmp.ne.s32.totalorder %s64, %s66
      %p73 = scmp.eq.s32.totalorder %s23, 1
      %p74 = por %p72, %p73
      %p75 = scmp.ne.s32.totalorder %s66, %s67
      %p76 = scmp.eq.s32.totalorder %s23, 0
      %p77 = por %p75, %p76
      %p78 = scmp.ne.s32.totalorder %s66, %s67
      %p79 = scmp.eq.s32.totalorder %s24, 1
      %p80 = por %p78, %p79
      %p82 = scmp.ne.s32.totalorder %s67, %s81
      %p83 = scmp.eq.s32.totalorder %s24, 0
      %p84 = por %p82, %p83
      %s86 = sadd.s32 %s85, 1
      %p89 = scmp.eq.s32.totalorder %s18, 1
      %p90 = scmp.ne.s32.totalorder %s85, %s87
      %p91 = scmp.eq.s32.totalorder %s18, 0
      %p92 = por %p90, %p91
      %p93 = scmp.ne.s32.totalorder %s85, %s87
      %p94 = scmp.eq.s32.totalorder %s23, 1
      %p95 = por %p93, %p94
      %p96 = scmp.ne.s32.totalorder %s87, %s88
      %p97 = scmp.eq.s32.totalorder %s23, 0
      %p98 = por %p96, %p97
      %p99 = scmp.ne.s32.totalorder %s87, %s88
      %p100 = scmp.eq.s32.totalorder %s24, 1
      %p101 = por %p99, %p100
      %p103 = scmp.ne.s32.totalorder %s88, %s102
      %p104 = scmp.eq.s32.totalorder %s24, 0
      %p105 = por %p103, %p104
      %s107 = sadd.s32 %s106, 1
      %p110 = scmp.eq.s32.totalorder %s18, 1
      %p111 = scmp.ne.s32.totalorder %s106, %s108
      %p112 = scmp.eq.s32.totalorder %s18, 0
      %p113 = por %p111, %p112
      %p114 = scmp.ne.s32.totalorder %s106, %s108
      %p115 = scmp.eq.s32.totalorder %s23, 1
      %p116 = por %p114, %p115
      %p117 = scmp.ne.s32.totalorder %s108, %s109
      %p118 = scmp.eq.s32.totalorder %s23, 0
      %p119 = por %p117, %p118
      %p120 = scmp.ne.s32.totalorder %s108, %s109
      %p121 = scmp.eq.s32.totalorder %s24, 1
      %p122 = por %p120, %p121
      %p124 = scmp.ne.s32.totalorder %s109, %s123
      %p125 = scmp.eq.s32.totalorder %s24, 0
      %p126 = por %p124, %p125
      %s128 = sadd.s32 %s127, 1
      %p131 = scmp.eq.s32.totalorder %s18, 1
      %p132 = scmp.ne.s32.totalorder %s127, %s129
      %p133 = scmp.eq.s32.totalorder %s18, 0
      %p134 = por %p132, %p133
      %p135 = scmp.ne.s32.totalorder %s127, %s129
      %p136 = scmp.eq.s32.totalorder %s23, 1
      %p137 = por %p135, %p136
      %p138 = scmp.ne.s32.totalorder %s129, %s130
      %p139 = scmp.eq.s32.totalorder %s23, 0
      %p140 = por %p138, %p139
      %p141 = scmp.ne.s32.totalorder %s129, %s130
      %p142 = scmp.eq.s32.totalorder %s24, 1
      %p143 = por %p141, %p142
      %p145 = scmp.ne.s32.totalorder %s130, %s144
      %p146 = scmp.eq.s32.totalorder %s24, 0
      %p147 = por %p145, %p146
      %s148 = ssub.s32 %s25, %s37
      %p149 = scmp.eq.s32.totalorder %s148, 0
      %s151 = sadd.s32 %s150, 1
      %s152 = scalar_select %p149, %s150, %s151
      %p155 = pneg %p149
      %p156 = scmp.eq.s32.totalorder %s18, 1
      %p157 = por %p155, %p156
      %p158 = scmp.ne.s32.totalorder %s150, %s153
      %p159 = scmp.eq.s32.totalorder %s18, 0
      %p160 = por %p158, %p159
      %p161 = scmp.ne.s32.totalorder %s150, %s153
      %p162 = scmp.eq.s32.totalorder %s23, 1
      %p163 = por %p161, %p162
      %p164 = scmp.ne.s32.totalorder %s153, %s154
      %p165 = scmp.eq.s32.totalorder %s23, 0
      %p166 = por %p164, %p165
      %p167 = scmp.ne.s32.totalorder %s153, %s154
      %p168 = scmp.eq.s32.totalorder %s24, 1
      %p169 = por %p167, %p168
      %p171 = scmp.ne.s32.totalorder %s154, %s170
      %p172 = scmp.eq.s32.totalorder %s24, 0
      %p173 = por %p171, %p172
      %p174 = scmp.le.s32.totalorder 1, %s18
      %p175 = scmp.lt.s32.totalorder %s18, 3
      %p176 = pnand %p174, %p175
      %p177 = pneg %p176
      // Predicated region
      $region9: #{tpu_custom_call.1} parent=5 // pred_check
        _
      $region10: #{tpu_custom_call.1} parent=5 // pred_check_branch
        %179 = sbr.rel (%p176) target = $region12
      $region11: #{tpu_custom_call.1} parent=5 // pred_region
        %s180 = ssub.s32 %s18, 1
        // Predicated region
        $region13: #{tpu_custom_call.1} parent=11 // pred_check
          %p181 = pneg %p77
        $region14: #{tpu_custom_call.1} parent=11 // pred_check_branch
          %183 = sbr.rel (%p181) target = $region16
        $region15: #{tpu_custom_call.1} parent=11 // pred_region
          %s185 = ssub.s32 2048, 2048
          %186 = vsyncadd [#allocation7], %s185
          %s187 = sshll.u32 [#allocation6], 4
          %s188 = int_to_ptr.vmem [resolvable:$true] %s187
          %193 = dma.hbm_to_vmem [thread:$0]  %s1, 2048, %s188, [#allocation7], 128, 128, 8
        $region16: #{tpu_custom_call.1} parent=11 // pred_fallthru
          _
        // Predicated region
        $region17: #{tpu_custom_call.1} parent=11 // pred_check
          %p194 = pneg %p98
        $region18: #{tpu_custom_call.1} parent=11 // pred_check_branch
          %196 = sbr.rel (%p194) target = $region20
        $region19: #{tpu_custom_call.1} parent=11 // pred_region
          _
        $region20: #{tpu_custom_call.1} parent=11 // pred_fallthru
          _
        // Predicated region
        $region21: #{tpu_custom_call.1} parent=11 // pred_check
          %p197 = pneg %p119
        $region22: #{tpu_custom_call.1} parent=11 // pred_check_branch
          %199 = sbr.rel (%p197) target = $region24
        $region23: #{tpu_custom_call.1} parent=11 // pred_region
          %s201 = ssub.s32 2048, 2048
          %202 = vsyncadd [#allocation7], %s201
          %s203 = sshll.u32 [#allocation8], 4
          %s204 = int_to_ptr.vmem [resolvable:$true] %s203
          %209 = dma.hbm_to_vmem [thread:$0]  %s3, 2048, %s204, [#allocation7], 128, 128, 8
        $region24: #{tpu_custom_call.1} parent=11 // pred_fallthru
          _
        // Predicated region
        $region25: #{tpu_custom_call.1} parent=11 // pred_check
          %p210 = pneg %p140
        $region26: #{tpu_custom_call.1} parent=11 // pred_check_branch
          %212 = sbr.rel (%p210) target = $region28
        $region27: #{tpu_custom_call.1} parent=11 // pred_region
          _
        $region28: #{tpu_custom_call.1} parent=11 // pred_fallthru
          _
      $region12: #{tpu_custom_call.1} parent=5 // pred_fallthru
        _
      %p213 = scmp.lt.s32.totalorder %s18, 2
      // Predicated region
      $region29: #{tpu_custom_call.1} parent=5 // pred_check
        %p214 = pneg %p213
      $region30: #{tpu_custom_call.1} parent=5 // pred_check_branch
        %216 = sbr.rel (%p214) target = $region32
      $region31: #{tpu_custom_call.1} parent=5 // pred_region
        // Predicated region
        $region33: #{tpu_custom_call.1} parent=31 // pred_check
          %p217 = pneg %p50
        $region34: #{tpu_custom_call.1} parent=31 // pred_check_branch
          %219 = sbr.rel (%p217) target = $region36
        $region35: #{tpu_custom_call.1} parent=31 // pred_region
          %s220 = sand.u32 %s40, 1
          %s221 = scalar_lea.sflag [#allocation4], %s220
          %s222 = sand.u32 %s40, 1
          %s223 = smul.addr %s222, 16
          %s224 = scalar_lea.vmem [#allocation3], %s223
          %s225 = smul.u32 2, %s25
          %s227 = ssub.s32 256, 256
          %228 = vsyncadd %s221, %s227
          %s229 = smul.addr %s225, 128
          %s230 = scalar_lea.hbm %s0, %s229
          %s231 = sshll.u32 %s224, 4
          %s232 = int_to_ptr.vmem [resolvable:$true] %s231
          %237 = dma.hbm_to_vmem [thread:$0]  %s230, 256, %s232, %s221, 128, 128, 8
        $region36: #{tpu_custom_call.1} parent=31 // pred_fallthru
          _
      $region32: #{tpu_custom_call.1} parent=5 // pred_fallthru
        _
      %p238 = scmp.le.s32.totalorder 1, %s18
      %p239 = scmp.lt.s32.totalorder %s18, 3
      %p240 = pnand %p238, %p239
      %p241 = pneg %p240
      // Predicated region
      $region37: #{tpu_custom_call.1} parent=5 // pred_check
        _
      $region38: #{tpu_custom_call.1} parent=5 // pred_check_branch
        %243 = sbr.rel (%p240) target = $region40
      $region39: #{tpu_custom_call.1} parent=5 // pred_region
        %s244 = ssub.s32 %s18, 1
        %s245 = sand.u32 %s43, 1
        %s246 = scalar_lea.sflag [#allocation4], %s245
        %s247 = sand.u32 %s43, 1
        %s248 = smul.addr %s247, 16
        %s249 = scalar_lea.vmem [#allocation3], %s248
        // Predicated region
        $region41: #{tpu_custom_call.1} parent=39 // pred_check
          %p250 = pneg %p56
        $region42: #{tpu_custom_call.1} parent=39 // pred_check_branch
          %252 = sbr.rel (%p250) target = $region44
        $region43: #{tpu_custom_call.1} parent=39 // pred_region
          %253 = dma.done %s246, 256
        $region44: #{tpu_custom_call.1} parent=39 // pred_fallthru
          _
        // Predicated region
        $region45: #{tpu_custom_call.1} parent=39 // pred_check
          %p254 = pneg %p77
        $region46: #{tpu_custom_call.1} parent=39 // pred_check_branch
          %256 = sbr.rel (%p254) target = $region48
        $region47: #{tpu_custom_call.1} parent=39 // pred_region
          %257 = dma.done [#allocation7], 2048
        $region48: #{tpu_custom_call.1} parent=39 // pred_fallthru
          _
        // Predicated region
        $region49: #{tpu_custom_call.1} parent=39 // pred_check
          %p258 = pneg %p119
        $region50: #{tpu_custom_call.1} parent=39 // pred_check_branch
          %260 = sbr.rel (%p258) target = $region52
        $region51: #{tpu_custom_call.1} parent=39 // pred_region
          %261 = dma.done [#allocation7], 2048
        $region52: #{tpu_custom_call.1} parent=39 // pred_fallthru
          _
        %s262 = sand.u32 %s43, 1
        %s263 = scalar_lea.sflag [#allocation4], %s262
        %s264 = sand.u32 %s43, 1
        %s265 = smul.addr %s264, 16
        %s266 = scalar_lea.vmem [#allocation3], %s265
        %p267 = pneg %p56
        %p268 = pneg %p53
        %p269 = pneg %p77
        %p270 = pneg %p74
        %p271 = pneg %p98
        %p272 = pneg %p95
        %p273 = pneg %p119
        %p274 = pneg %p116
        %p275 = pneg %p140
        %p276 = pneg %p137
        %p277 = pneg %p166
        %p278 = pneg %p163
        %s279 = sand.u32 %s153, 1
        %s280 = scalar_lea.sflag [#allocation5], %s279
        %s281 = sand.u32 %s153, 1
        %s282 = smul.addr %s281, 16
        %s283 = scalar_lea.vmem [#allocation9], %s282
        %s284 = smul.u32 2, %s27
        %s285 = smul.u32 2, %s27
        %p286 = scmp.eq.s32.totalorder %s28, 0
        // Predicated region
        $region53: #{tpu_custom_call.1} parent=39 // pred_check
          %p287 = pneg %p286
        $region54: #{tpu_custom_call.1} parent=39 // pred_check_branch
          %289 = sbr.rel (%p287) target = $region56
        $region55: #{tpu_custom_call.1} parent=39 // pred_region
          %290 = vst [vmem:[#allocation2] sm:$0xff] 0.0
          %291 = vst [vmem:[#allocation2 + $0x8] sm:$0xff] 0.0
        $region56: #{tpu_custom_call.1} parent=39 // pred_fallthru
          _
        %v292 = vld [vmem:[%s249] sm:$0xff]
        %v293 = vld [vmem:[%s249 + $0x8] sm:$0xff]
        %v294 = vld [vmem:[#allocation6] sm:$0xff]
        %v295 = vld [vmem:[#allocation6 + $0x8] sm:$0xff]
        %v296 = vld [vmem:[#allocation6 + $0x10] sm:$0xff]
        %v297 = vld [vmem:[#allocation6 + $0x18] sm:$0xff]
        %v298 = vld [vmem:[#allocation6 + $0x20] sm:$0xff]
        %v299 = vld [vmem:[#allocation6 + $0x28] sm:$0xff]
        %v300 = vld [vmem:[#allocation6 + $0x30] sm:$0xff]
        %v301 = vld [vmem:[#allocation6 + $0x38] sm:$0xff]
        %v302 = vld [vmem:[#allocation6 + $0x40] sm:$0xff]
        %v303 = vld [vmem:[#allocation6 + $0x48] sm:$0xff]
        %v304 = vld [vmem:[#allocation6 + $0x50] sm:$0xff]
        %v305 = vld [vmem:[#allocation6 + $0x58] sm:$0xff]
        %v306 = vld [vmem:[#allocation6 + $0x60] sm:$0xff]
        %v307 = vld [vmem:[#allocation6 + $0x68] sm:$0xff]
        %v308 = vld [vmem:[#allocation6 + $0x70] sm:$0xff]
        %v309 = vld [vmem:[#allocation6 + $0x78] sm:$0xff]
        %v310 = vld [vmem:[%s2] sm:$0x1]
        %v312 = vlaneseq
        %v313 = vshrl.u32 %v312, 7
        %v314 = vsub.s32 0, %v313
        %v315 = vrot.slane %v310, %v314
        %317 = vmatprep.subr.mxu0 0.0
        %318 = vmatpush1.msra.mxu0 %v309
        %319 = vmatprep.subr.mxu0 0.0
        %320 = vmatpush1.msra.mxu0 %v308
        %321 = vmatprep.subr.mxu0 0.0
        %322 = vmatpush1.msra.mxu0 %v307
        %323 = vmatprep.subr.mxu0 0.0
        %324 = vmatpush1.msra.mxu0 %v306
        %325 = vmatprep.subr.mxu0 0.0
        %326 = vmatpush1.msra.mxu0 %v305
        %327 = vmatprep.subr.mxu0 0.0
        %328 = vmatpush1.msra.mxu0 %v304
        %329 = vmatprep.subr.mxu0 0.0
        %330 = vmatpush1.msra.mxu0 %v303
        %331 = vmatprep.subr.mxu0 0.0
        %332 = vmatpush1.msra.mxu0 %v302
        %333 = vmatprep.subr.mxu0 0.0
        %334 = vmatpush1.msra.mxu0 %v301
        %335 = vmatprep.subr.mxu0 0.0
        %336 = vmatpush1.msra.mxu0 %v300
        %337 = vmatprep.subr.mxu0 0.0
        %338 = vmatpush1.msra.mxu0 %v299
        %339 = vmatprep.subr.mxu0 0.0
        %340 = vmatpush1.msra.mxu0 %v298
        %341 = vmatprep.subr.mxu0 0.0
        %342 = vmatpush1.msra.mxu0 %v297
        %343 = vmatprep.subr.mxu0 0.0
        %344 = vmatpush1.msra.mxu0 %v296
        %345 = vmatprep.subr.mxu0 0.0
        %346 = vmatpush1.msra.mxu0 %v295
        %347 = vmatprep.subr.mxu0 0.0
        %348 = vmatpush1.msra.mxu0 %v294
        %349 = vmatprep.subr.mxu0 0.0
        %350 = vmatpush2.msra.mxu0 0.0
        %351 = vmatprep.subr.mxu0 0.0
        %352 = vmatpush2.msra.mxu0 0.0
        %353 = vmatprep.subr.mxu0 0.0
        %354 = vmatpush2.msra.mxu0 0.0
        %355 = vmatprep.subr.mxu0 0.0
        %356 = vmatpush2.msra.mxu0 0.0
        %357 = vmatprep.subr.mxu0 0.0
        %358 = vmatpush2.msra.mxu0 0.0
        %359 = vmatprep.subr.mxu0 0.0
        %360 = vmatpush2.msra.mxu0 0.0
        %361 = vmatprep.subr.mxu0 0.0
        %362 = vmatpush2.msra.mxu0 0.0
        %363 = vmatprep.subr.mxu0 0.0
        %364 = vmatpush2.msra.mxu0 0.0
        %365 = vmatprep.subr.mxu0 0.0
        %366 = vmatpush2.msra.mxu0 0.0
        %367 = vmatprep.subr.mxu0 0.0
        %368 = vmatpush2.msra.mxu0 0.0
        %369 = vmatprep.subr.mxu0 0.0
        %370 = vmatpush2.msra.mxu0 0.0
        %371 = vmatprep.subr.mxu0 0.0
        %372 = vmatpush2.msra.mxu0 0.0
        %373 = vmatprep.subr.mxu0 0.0
        %374 = vmatpush2.msra.mxu0 0.0
        %375 = vmatprep.subr.mxu0 0.0
        %376 = vmatpush2.msra.mxu0 0.0
        %377 = vmatprep.subr.mxu0 0.0
        %378 = vmatpush2.msra.mxu0 0.0
        %379 = vmatprep.subr.mxu0 0.0
        %380 = vmatpush2.msra.mxu0 0.0
        %381 = vmatprep.mubr.f32.mxu0 0.0
        %382 = vmatmul.mubr.f32.gmra.mxu0 %v292
        %v383 = vpop.f32.mrf.mxu0
        %v384 = vadd.f32 %v315, %v383
        %v385 = vpop.f32.mrf.mxu0
        %386 = vmatprep.mubr.f32.mxu0 0.0
        %387 = vmatmul.mubr.f32.gmra.mxu0 %v293
        %v388 = vpop.f32.mrf.mxu0
        %v389 = vadd.f32 %v315, %v388
        %v390 = vpop.f32.mrf.mxu0
        %391 = vdwg.mxu0
        %v392 = vmul.f32 %v384, 0.5
        %v393 = vmul.f32 %v389, 0.5
        %v394 = vmul.f32 %v384, 0.044715
        %v395 = vmul.f32 %v389, 0.044715
        %v396 = vmul.f32 %v394, %v384
        %v397 = vmul.f32 %v395, %v389
        %v398 = vmul.f32 %v396, %v384
        %v399 = vmul.f32 %v397, %v389
        %v400 = vadd.f32 %v384, %v398
        %v401 = vadd.f32 %v389, %v399
        %v402 = vmul.f32 %v400, 0.7978846
        %v403 = vmul.f32 %v401, 0.7978846
        %v404 = vtanh.pop %v402
        %v405 = vtanh.pop %v403
        %v406 = vadd.f32 %v404, 1.0
        %v407 = vadd.f32 %v405, 1.0
        %v408 = vmul.f32 %v392, %v406
        %v409 = vmul.f32 %v393, %v407
        %v410 = vld [vmem:[#allocation2] sm:$0xff]
        %v411 = vld [vmem:[#allocation2 + $0x8] sm:$0xff]
        %v412 = vld [vmem:[#allocation8] sm:$0xff]
        %v413 = vld [vmem:[#allocation8 + $0x8] sm:$0xff]
        %v414 = vld [vmem:[#allocation8 + $0x10] sm:$0xff]
        %v415 = vld [vmem:[#allocation8 + $0x18] sm:$0xff]
        %v416 = vld [vmem:[#allocation8 + $0x20] sm:$0xff]
        %v417 = vld [vmem:[#allocation8 + $0x28] sm:$0xff]
        %v418 = vld [vmem:[#allocation8 + $0x30] sm:$0xff]
        %v419 = vld [vmem:[#allocation8 + $0x38] sm:$0xff]
        %v420 = vld [vmem:[#allocation8 + $0x40] sm:$0xff]
        %v421 = vld [vmem:[#allocation8 + $0x48] sm:$0xff]
        %v422 = vld [vmem:[#allocation8 + $0x50] sm:$0xff]
        %v423 = vld [vmem:[#allocation8 + $0x58] sm:$0xff]
        %v424 = vld [vmem:[#allocation8 + $0x60] sm:$0xff]
        %v425 = vld [vmem:[#allocation8 + $0x68] sm:$0xff]
        %v426 = vld [vmem:[#allocation8 + $0x70] sm:$0xff]
        %v427 = vld [vmem:[#allocation8 + $0x78] sm:$0xff]
        %428 = vmatprep.subr.mxu0 0.0
        %429 = vmatpush1.msra.mxu0 %v427
        %430 = vmatprep.subr.mxu0 0.0
        %431 = vmatpush1.msra.mxu0 %v426
        %432 = vmatprep.subr.mxu0 0.0
        %433 = vmatpush1.msra.mxu0 %v425
        %434 = vmatprep.subr.mxu0 0.0
        %435 = vmatpush1.msra.mxu0 %v424
        %436 = vmatprep.subr.mxu0 0.0
        %437 = vmatpush1.msra.mxu0 %v423
        %438 = vmatprep.subr.mxu0 0.0
        %439 = vmatpush1.msra.mxu0 %v422
        %440 = vmatprep.subr.mxu0 0.0
        %441 = vmatpush1.msra.mxu0 %v421
        %442 = vmatprep.subr.mxu0 0.0
        %443 = vmatpush1.msra.mxu0 %v420
        %444 = vmatprep.subr.mxu0 0.0
        %445 = vmatpush1.msra.mxu0 %v419
        %446 = vmatprep.subr.mxu0 0.0
        %447 = vmatpush1.msra.mxu0 %v418
        %448 = vmatprep.subr.mxu0 0.0
        %449 = vmatpush1.msra.mxu0 %v417
        %450 = vmatprep.subr.mxu0 0.0
        %451 = vmatpush1.msra.mxu0 %v416
        %452 = vmatprep.subr.mxu0 0.0
        %453 = vmatpush1.msra.mxu0 %v415
        %454 = vmatprep.subr.mxu0 0.0
        %455 = vmatpush1.msra.mxu0 %v414
        %456 = vmatprep.subr.mxu0 0.0
        %457 = vmatpush1.msra.mxu0 %v413
        %458 = vmatprep.subr.mxu0 0.0
        %459 = vmatpush1.msra.mxu0 %v412
        %460 = vmatprep.subr.mxu0 0.0
        %461 = vmatpush2.msra.mxu0 0.0
        %462 = vmatprep.subr.mxu0 0.0
        %463 = vmatpush2.msra.mxu0 0.0
        %464 = vmatprep.subr.mxu0 0.0
        %465 = vmatpush2.msra.mxu0 0.0
        %466 = vmatprep.subr.mxu0 0.0
        %467 = vmatpush2.msra.mxu0 0.0
        %468 = vmatprep.subr.mxu0 0.0
        %469 = vmatpush2.msra.mxu0 0.0
        %470 = vmatprep.subr.mxu0 0.0
        %471 = vmatpush2.msra.mxu0 0.0
        %472 = vmatprep.subr.mxu0 0.0
        %473 = vmatpush2.msra.mxu0 0.0
        %474 = vmatprep.subr.mxu0 0.0
        %475 = vmatpush2.msra.mxu0 0.0
        %476 = vmatprep.subr.mxu0 0.0
        %477 = vmatpush2.msra.mxu0 0.0
        %478 = vmatprep.subr.mxu0 0.0
        %479 = vmatpush2.msra.mxu0 0.0
        %480 = vmatprep.subr.mxu0 0.0
        %481 = vmatpush2.msra.mxu0 0.0
        %482 = vmatprep.subr.mxu0 0.0
        %483 = vmatpush2.msra.mxu0 0.0
        %484 = vmatprep.subr.mxu0 0.0
        %485 = vmatpush2.msra.mxu0 0.0
        %486 = vmatprep.subr.mxu0 0.0
        %487 = vmatpush2.msra.mxu0 0.0
        %488 = vmatprep.subr.mxu0 0.0
        %489 = vmatpush2.msra.mxu0 0.0
        %490 = vmatprep.subr.mxu0 0.0
        %491 = vmatpush2.msra.mxu0 0.0
        %492 = vmatprep.mubr.f32.mxu0 0.0
        %493 = vmatmul.mubr.f32.gmra.mxu0 %v408
        %v494 = vpop.f32.mrf.mxu0
        %v495 = vadd.f32 0.0, %v494
        %v496 = vpop.f32.mrf.mxu0
        %497 = vmatprep.mubr.f32.mxu0 0.0
        %498 = vmatmul.mubr.f32.gmra.mxu0 %v409
        %v499 = vpop.f32.mrf.mxu0
        %v500 = vadd.f32 0.0, %v499
        %v501 = vpop.f32.mrf.mxu0
        %502 = vdwg.mxu0
        %v503 = vadd.f32 %v410, %v495
        %v504 = vadd.f32 %v411, %v500
        %505 = vst [vmem:[#allocation2] sm:$0xff] %v503
        %506 = vst [vmem:[#allocation2 + $0x8] sm:$0xff] %v504
        // Predicated region
        $region57: #{tpu_custom_call.1} parent=39 // pred_check
          %p507 = pneg %p286
        $region58: #{tpu_custom_call.1} parent=39 // pred_check_branch
          %509 = sbr.rel (%p507) target = $region60
        $region59: #{tpu_custom_call.1} parent=39 // pred_region
          %v510 = vld [vmem:[#allocation2] sm:$0xff]
          %v511 = vld [vmem:[#allocation2 + $0x8] sm:$0xff]
          %v512 = vld [vmem:[%s4] sm:$0x1]
          %v514 = vlaneseq
          %v515 = vshrl.u32 %v514, 7
          %v516 = vsub.s32 0, %v515
          %v517 = vrot.slane %v512, %v516
          %v519 = vadd.f32 %v510, %v517
          %v520 = vadd.f32 %v511, %v517
          %521 = vst [vmem:[%s283] sm:$0xff] %v519
          %522 = vst [vmem:[%s283 + $0x8] sm:$0xff] %v520
        $region60: #{tpu_custom_call.1} parent=39 // pred_fallthru
          _
        %s523 = sand.u32 %s153, 1
        %s524 = scalar_lea.sflag [#allocation5], %s523
        %s525 = sand.u32 %s153, 1
        %s526 = smul.addr %s525, 16
        %s527 = scalar_lea.vmem [#allocation9], %s526
        // Predicated region
        $region61: #{tpu_custom_call.1} parent=39 // pred_check
          %p528 = pneg %p163
        $region62: #{tpu_custom_call.1} parent=39 // pred_check_branch
          %530 = sbr.rel (%p528) target = $region64
        $region63: #{tpu_custom_call.1} parent=39 // pred_region
          %s531 = smul.u32 2, %s27
          %s533 = ssub.s32 256, 256
          %534 = vsyncadd %s524, %s533
          %s535 = smul.addr %s531, 128
          %s536 = scalar_lea.hbm %s5, %s535
          %s537 = sshll.u32 %s527, 4
          %s538 = int_to_ptr.vmem [resolvable:$true] %s537
          %543 = dma.vmem_to_hbm [thread:$0]  %s538, 256, %s536, %s524, 128, 128, 8
        $region64: #{tpu_custom_call.1} parent=39 // pred_fallthru
          _
      $region40: #{tpu_custom_call.1} parent=5 // pred_fallthru
        _
      %p544 = scmp.le.s32.totalorder 2, %s18
      // Predicated region
      $region65: #{tpu_custom_call.1} parent=5 // pred_check
        %p545 = pneg %p544
      $region66: #{tpu_custom_call.1} parent=5 // pred_check_branch
        %547 = sbr.rel (%p545) target = $region68
      $region67: #{tpu_custom_call.1} parent=5 // pred_region
        %s548 = ssub.s32 %s18, 2
        // Predicated region
        $region69: #{tpu_custom_call.1} parent=67 // pred_check
          %p549 = pneg %p169
        $region70: #{tpu_custom_call.1} parent=67 // pred_check_branch
          %551 = sbr.rel (%p549) target = $region72
        $region71: #{tpu_custom_call.1} parent=67 // pred_region
          %s552 = sand.u32 %s154, 1
          %s553 = scalar_lea.sflag [#allocation5], %s552
          %s554 = sand.u32 %s154, 1
          %s555 = smul.addr %s554, 16
          %s556 = scalar_lea.vmem [#allocation9], %s555
          %557 = dma.done %s553, 256
        $region72: #{tpu_custom_call.1} parent=67 // pred_fallthru
          _
      $region68: #{tpu_custom_call.1} parent=5 // pred_fallthru
        _
    $region6: #{tpu_custom_call.1} parent=1 // loop_footer
      %s22 = sadd.s32 1, %s18
    $region7: #{tpu_custom_call.1} parent=1 // loop_footer_branch
      %17 = sbr.rel target = $region3
    $region8: #{tpu_custom_call.1} parent=1 // loop_exit
      _
    %558 = vsyncpa [#allocation4], 1
    %s559 = scalar_lea.sflag [#allocation4], 1
    %560 = vsyncpa %s559, 1
    %561 = vsyncpa [#allocation7], 1
    %562 = vsyncpa [#allocation5], 1
    %s563 = scalar_lea.sflag [#allocation5], 1
    %564 = vsyncpa %s563, 1

</llo_original>
